<compile_context>
chip_gen: v5e
topology: v5e:2x2
jax: 0.10.0
libtpu: 0.0.40
codegen_flags: <defaults>
</compile_context>

<pallas_src>
import functools
import math

import jax
import jax.numpy as jnp
from jax import lax
from jax.experimental import pallas as pl
from jax.experimental.pallas import tpu as pltpu


_INV_SQRT2 = 1.0 / math.sqrt(2.0)


def _gelu_f32(x):
    # Exact GELU (erf form) == torch.nn.GELU(approximate='none').
    # TODO(synk): optionally switch to tanh-approx GELU (EUP path) on v6e/v7x if accuracy allows.
    return 0.5 * x * (1.0 + lax.erf(x * _INV_SQRT2))


def _round_up(n, m):
    return (n + m - 1) // m * m


def mlp_kernel(x_ref, w0_ref, b0_ref, w1_ref, b1_ref, o_ref, h_ref, t_ref):
    """Fused 4-layer MLP: lin0+gelu -> lin1+gelu -> lin0+gelu -> lin1 (shared weights)."""
    cdt = h_ref.dtype  # compute/storage dtype for intermediates == weight dtype

    # layer1: lin_0 + act   (f32 accumulate on MXU, operands stay in native dtype)
    a1 = jnp.dot(x_ref[...], w0_ref[...], preferred_element_type=jnp.float32)
    h_ref[...] = _gelu_f32(a1 + b0_ref[...]).astype(cdt)

    # layer2: lin_1 + act
    a2 = jnp.dot(h_ref[...], w1_ref[...], preferred_element_type=jnp.float32)
    t_ref[...] = _gelu_f32(a2 + b1_ref[...]).astype(cdt)

    # layer3: lin_0 (shared weights) + act
    a3 = jnp.dot(t_ref[...], w0_ref[...], preferred_element_type=jnp.float32)
    h_ref[...] = _gelu_f32(a3 + b0_ref[...]).astype(cdt)

    # layer4: lin_1 (shared weights), no activation
    a4 = jnp.dot(h_ref[...], w1_ref[...], preferred_element_type=jnp.float32)
    o_ref[...] = (a4 + b1_ref[...]).astype(o_ref.dtype)


@functools.partial(jax.jit, static_argnames=("tm",))
def mlp_forward(x, w0, b0, w1, b1, *, tm=256):
    """x: (..., d_model) -> (..., d_model).

    Weights: w0 (d_model, 4*d_model), w1 (4*d_model, d_model) -- i.e. transposed
    vs PyTorch Linear.weight. Biases: (1, out_features).
    """
    d_model = x.shape[-1]
    d_hidden = w0.shape[1]
    lead = x.shape[:-1]

    x2d = x.reshape(-1, d_model)
    n_rows = x2d.shape[0]

    # Lane-dense feature dims (multiples of 128); zero padding is exact (see header).
    dmp = _round_up(d_model, 128)
    dhp = _round_up(d_hidden, 128)

    # MXU-aligned row tile; shrink for tiny inputs, keep a multiple of 8 (sublane).
    tm_eff = max(8, _round_up(min(tm, _round_up(n_rows, 8)), 8))
    n_rows_pad = _round_up(n_rows, tm_eff)

    x_p = jnp.pad(x2d, ((0, n_rows_pad - n_rows), (0, dmp - d_model)))
    w0_p = jnp.pad(w0, ((0, dmp - d_model), (0, dhp - d_hidden)))
    b0_p = jnp.pad(b0.reshape(1, -1), ((0, 0), (0, dhp - d_hidden)))
    w1_p = jnp.pad(w1, ((0, dhp - d_hidden), (0, dmp - d_model)))
    b1_p = jnp.pad(b1.reshape(1, -1), ((0, 0), (0, dmp - d_model)))

    isz = lambda a: jnp.dtype(a.dtype).itemsize
    # VMEM budget: double-buffered x/out tiles + double-buffered resident weights
    # + explicit scratch, with headroom.
    tile_bytes = 2 * (tm_eff * dmp * isz(x_p))                       # x tile + out tile
    weight_bytes = 2 * (dmp * dhp * isz(w0_p)) + (dhp + dmp) * isz(b0_p)
    scratch_bytes = (tm_eff * dhp + tm_eff * dmp) * isz(w0_p)
    needed = 2 * tile_bytes + 2 * weight_bytes + scratch_bytes
    vmem_limit = int(min(max(32 << 20, int(needed * 1.5) + (2 << 20)), 100 << 20))

    grid = (n_rows_pad // tm_eff,)

    out = pl.pallas_call(
        mlp_kernel,
        out_shape=jax.ShapeDtypeStruct((n_rows_pad, dmp), x.dtype),
        grid_spec=pltpu.PrefetchScalarGridSpec(
            num_scalar_prefetch=0,
            grid=grid,
            in_specs=[
                pl.BlockSpec((tm_eff, dmp), lambda i: (i, 0)),   # x row tile
                pl.BlockSpec((dmp, dhp), lambda i: (0, 0)),      # w0 (resident)
                pl.BlockSpec((1, dhp), lambda i: (0, 0)),        # b0 (resident)
                pl.BlockSpec((dhp, dmp), lambda i: (0, 0)),      # w1 (resident)
                pl.BlockSpec((1, dmp), lambda i: (0, 0)),        # b1 (resident)
            ],
            out_specs=pl.BlockSpec((tm_eff, dmp), lambda i: (i, 0)),
            scratch_shapes=[
                pltpu.VMEM((tm_eff, dhp), w0.dtype),   # hidden activation (tm, 4d)
                pltpu.VMEM((tm_eff, dmp), w0.dtype),   # layer2 output (tm, d)
            ],
        ),
        compiler_params=pltpu.CompilerParams(
            dimension_semantics=("parallel",),    # megacore-shardable row grid
            vmem_limit_bytes=vmem_limit,
        ),
    )(x_p, w0_p, b0_p, w1_p, b1_p)

    out = out[:n_rows, :d_model]
    return out.reshape(*lead, d_model)


def _reference(x, w0, b0, w1, b1):
    hp = lax.Precision.HIGHEST
    h = _gelu_f32(jnp.dot(x, w0, precision=hp) + b0)
    h = _gelu_f32(jnp.dot(h, w1, precision=hp) + b1)
    h = _gelu_f32(jnp.dot(h, w0, precision=hp) + b0)
    return jnp.dot(h, w1, precision=hp) + b1


def _make_params(key, d_model, dtype=jnp.float32):
    d_hidden = 4 * d_model
    kw0, kb0, kw1, kb1 = jax.random.split(key, 4)
    bound0 = 1.0 / math.sqrt(d_model)
    bound1 = 1.0 / math.sqrt(d_hidden)
    w0 = jax.random.uniform(kw0, (d_model, d_hidden), dtype, -bound0, bound0)
    b0 = jax.random.uniform(kb0, (1, d_hidden), dtype, -bound0, bound0)
    w1 = jax.random.uniform(kw1, (d_hidden, d_model), dtype, -bound1, bound1)
    b1 = jax.random.uniform(kb1, (1, d_model), dtype, -bound1, bound1)
    return w0, b0, w1, b1


if __name__ == "__main__":
    key = jax.random.PRNGKey(0)
    k1, k2, kx1, kx2 = jax.random.split(key, 4)

    # Case 1: small shapes consistent with the module (batch=2, seq=8, d_model=32).
    batch, seq, d_model = 2, 8, 32
    x = jax.random.normal(kx1, (batch, seq, d_model), dtype=jnp.float32)
    w0, b0, w1, b1 = _make_params(k1, d_model)
    out = mlp_forward(x, w0, b0, w1, b1)           # tm auto-shrinks for tiny row count
    jax.block_until_ready(out)
    ref = _reference(x.reshape(-1, d_model), w0, b0, w1, b1).reshape(batch, seq, d_model)
    assert out.shape == x.shape
    assert jnp.allclose(out, ref, atol=1e-4, rtol=1e-4), float(jnp.max(jnp.abs(out - ref)))

    # Case 2: exercises MXU-aligned 128-row tiles, a multi-step parallel grid,
    # and lane-dense (128-wide) feature dims without padding.
    batch, seq, d_model = 4, 64, 128
    x = jax.random.normal(kx2, (batch, seq, d_model), dtype=jnp.float32)
    w0, b0, w1, b1 = _make_params(k2, d_model)
    out = mlp_forward(x, w0, b0, w1, b1, tm=128)
    jax.block_until_ready(out)
    ref = _reference(x.reshape(-1, d_model), w0, b0, w1, b1).reshape(batch, seq, d_model)
    assert out.shape == x.shape
    assert jnp.allclose(out, ref, atol=1e-4, rtol=1e-4), float(jnp.max(jnp.abs(out - ref)))

    print("KERNEL_OK")
</pallas_src>

<mosaic_0001>
module attributes {stable_mosaic.version = 11 : i64} {
  func.func @mlp_kernel(%arg0: i32, %arg1: memref<16x128xf32, #tpu.memory_space<vmem>>, %arg2: memref<128x128xf32, #tpu.memory_space<vmem>>, %arg3: memref<1x128xf32, #tpu.memory_space<vmem>>, %arg4: memref<128x128xf32, #tpu.memory_space<vmem>>, %arg5: memref<1x128xf32, #tpu.memory_space<vmem>>, %arg6: memref<16x128xf32, #tpu.memory_space<vmem>>, %arg7: memref<16x128xf32, #tpu.memory_space<vmem>>, %arg8: memref<16x128xf32, #tpu.memory_space<vmem>>) attributes {dimension_semantics = [#tpu.dimension_semantics<parallel>], iteration_bounds = array<i64: 1>, scalar_prefetch = 0 : i64, scratch_operands = 2 : i64, tpu.core_type = #tpu.core_type<tc>, window_params = [{transform_indices = @transform_0, window_bounds = array<i64: 16, 128>}, {pipeline_mode = #tpu.pipeline_mode<synchronous>, transform_indices = @transform_1, window_bounds = array<i64: 128, 128>}, {pipeline_mode = #tpu.pipeline_mode<synchronous>, transform_indices = @transform_2, window_bounds = array<i64: 1, 128>}, {pipeline_mode = #tpu.pipeline_mode<synchronous>, transform_indices = @transform_3, window_bounds = array<i64: 128, 128>}, {pipeline_mode = #tpu.pipeline_mode<synchronous>, transform_indices = @transform_4, window_bounds = array<i64: 1, 128>}, {transform_indices = @transform_5, window_bounds = array<i64: 16, 128>}]} {
    %c0 = arith.constant 0 : index
    %c0_0 = arith.constant 0 : index
    %0 = vector.load %arg1[%c0, %c0_0] : memref<16x128xf32, #tpu.memory_space<vmem>>, vector<16x128xf32>
    %c0_1 = arith.constant 0 : index
    %c0_2 = arith.constant 0 : index
    %1 = vector.load %arg2[%c0_1, %c0_2] : memref<128x128xf32, #tpu.memory_space<vmem>>, vector<128x128xf32>
    %cst = arith.constant dense<0.000000e+00> : vector<16x128xf32>
    %2 = tpu.matmul %0, %1, %cst {dimension_numbers = #tpu.dot_dimension_numbers<[1], [0], [0], [1], [0, 0, 1, 1], [], []>} : vector<16x128xf32>, vector<128x128xf32>, vector<16x128xf32> -> vector<16x128xf32>
    %c0_3 = arith.constant 0 : index
    %c0_4 = arith.constant 0 : index
    %3 = vector.load %arg3[%c0_3, %c0_4] : memref<1x128xf32, #tpu.memory_space<vmem>>, vector<1x128xf32>
    %4 = vector.broadcast %3 : vector<1x128xf32> to vector<16x128xf32>
    %5 = arith.addf %2, %4 : vector<16x128xf32>
    %cst_5 = arith.constant 5.000000e-01 : f32
    %6 = vector.broadcast %cst_5 : f32 to vector<16x128xf32>
    %7 = arith.mulf %6, %5 : vector<16x128xf32>
    %cst_6 = arith.constant 0.707106769 : f32
    %8 = vector.broadcast %cst_6 : f32 to vector<16x128xf32>
    %9 = arith.mulf %5, %8 : vector<16x128xf32>
    %10 = math.erf %9 : vector<16x128xf32>
    %cst_7 = arith.constant 1.000000e+00 : f32
    %11 = vector.broadcast %cst_7 : f32 to vector<16x128xf32>
    %12 = arith.addf %11, %10 : vector<16x128xf32>
    %13 = arith.mulf %7, %12 : vector<16x128xf32>
    %c0_8 = arith.constant 0 : index
    %c0_9 = arith.constant 0 : index
    %14 = vector.load %arg7[%c0_8, %c0_9] : memref<16x128xf32, #tpu.memory_space<vmem>>, vector<16x128xf32>
    tpu.vector_store %arg7[%c0_8, %c0_9], %13 {strides = array<i32>} : memref<16x128xf32, #tpu.memory_space<vmem>>, vector<16x128xf32>,
    %c0_10 = arith.constant 0 : index
    %c0_11 = arith.constant 0 : index
    %15 = vector.load %arg7[%c0_10, %c0_11] : memref<16x128xf32, #tpu.memory_space<vmem>>, vector<16x128xf32>
    %c0_12 = arith.constant 0 : index
    %c0_13 = arith.constant 0 : index
    %16 = vector.load %arg4[%c0_12, %c0_13] : memref<128x128xf32, #tpu.memory_space<vmem>>, vector<128x128xf32>
    %cst_14 = arith.constant dense<0.000000e+00> : vector<16x128xf32>
    %17 = tpu.matmul %15, %16, %cst_14 {dimension_numbers = #tpu.dot_dimension_numbers<[1], [0], [0], [1], [0, 0, 1, 1], [], []>} : vector<16x128xf32>, vector<128x128xf32>, vector<16x128xf32> -> vector<16x128xf32>
    %c0_15 = arith.constant 0 : index
    %c0_16 = arith.constant 0 : index
    %18 = vector.load %arg5[%c0_15, %c0_16] : memref<1x128xf32, #tpu.memory_space<vmem>>, vector<1x128xf32>
    %19 = vector.broadcast %18 : vector<1x128xf32> to vector<16x128xf32>
    %20 = arith.addf %17, %19 : vector<16x128xf32>
    %cst_17 = arith.constant 5.000000e-01 : f32
    %21 = vector.broadcast %cst_17 : f32 to vector<16x128xf32>
    %22 = arith.mulf %21, %20 : vector<16x128xf32>
    %cst_18 = arith.constant 0.707106769 : f32
    %23 = vector.broadcast %cst_18 : f32 to vector<16x128xf32>
    %24 = arith.mulf %20, %23 : vector<16x128xf32>
    %25 = math.erf %24 : vector<16x128xf32>
    %cst_19 = arith.constant 1.000000e+00 : f32
    %26 = vector.broadcast %cst_19 : f32 to vector<16x128xf32>
    %27 = arith.addf %26, %25 : vector<16x128xf32>
    %28 = arith.mulf %22, %27 : vector<16x128xf32>
    %c0_20 = arith.constant 0 : index
    %c0_21 = arith.constant 0 : index
    %29 = vector.load %arg8[%c0_20, %c0_21] : memref<16x128xf32, #tpu.memory_space<vmem>>, vector<16x128xf32>
    tpu.vector_store %arg8[%c0_20, %c0_21], %28 {strides = array<i32>} : memref<16x128xf32, #tpu.memory_space<vmem>>, vector<16x128xf32>,
    %c0_22 = arith.constant 0 : index
    %c0_23 = arith.constant 0 : index
    %30 = vector.load %arg8[%c0_22, %c0_23] : memref<16x128xf32, #tpu.memory_space<vmem>>, vector<16x128xf32>
    %c0_24 = arith.constant 0 : index
    %c0_25 = arith.constant 0 : index
    %31 = vector.load %arg2[%c0_24, %c0_25] : memref<128x128xf32, #tpu.memory_space<vmem>>, vector<128x128xf32>
    %cst_26 = arith.constant dense<0.000000e+00> : vector<16x128xf32>
    %32 = tpu.matmul %30, %31, %cst_26 {dimension_numbers = #tpu.dot_dimension_numbers<[1], [0], [0], [1], [0, 0, 1, 1], [], []>} : vector<16x128xf32>, vector<128x128xf32>, vector<16x128xf32> -> vector<16x128xf32>
    %c0_27 = arith.constant 0 : index
    %c0_28 = arith.constant 0 : index
    %33 = vector.load %arg3[%c0_27, %c0_28] : memref<1x128xf32, #tpu.memory_space<vmem>>, vector<1x128xf32>
    %34 = vector.broadcast %33 : vector<1x128xf32> to vector<16x128xf32>
    %35 = arith.addf %32, %34 : vector<16x128xf32>
    %cst_29 = arith.constant 5.000000e-01 : f32
    %36 = vector.broadcast %cst_29 : f32 to vector<16x128xf32>
    %37 = arith.mulf %36, %35 : vector<16x128xf32>
    %cst_30 = arith.constant 0.707106769 : f32
    %38 = vector.broadcast %cst_30 : f32 to vector<16x128xf32>
    %39 = arith.mulf %35, %38 : vector<16x128xf32>
    %40 = math.erf %39 : vector<16x128xf32>
    %cst_31 = arith.constant 1.000000e+00 : f32
    %41 = vector.broadcast %cst_31 : f32 to vector<16x128xf32>
    %42 = arith.addf %41, %40 : vector<16x128xf32>
    %43 = arith.mulf %37, %42 : vector<16x128xf32>
    %c0_32 = arith.constant 0 : index
    %c0_33 = arith.constant 0 : index
    %44 = vector.load %arg7[%c0_32, %c0_33] : memref<16x128xf32, #tpu.memory_space<vmem>>, vector<16x128xf32>
    tpu.vector_store %arg7[%c0_32, %c0_33], %43 {strides = array<i32>} : memref<16x128xf32, #tpu.memory_space<vmem>>, vector<16x128xf32>,
    %c0_34 = arith.constant 0 : index
    %c0_35 = arith.constant 0 : index
    %45 = vector.load %arg7[%c0_34, %c0_35] : memref<16x128xf32, #tpu.memory_space<vmem>>, vector<16x128xf32>
    %c0_36 = arith.constant 0 : index
    %c0_37 = arith.constant 0 : index
    %46 = vector.load %arg4[%c0_36, %c0_37] : memref<128x128xf32, #tpu.memory_space<vmem>>, vector<128x128xf32>
    %cst_38 = arith.constant dense<0.000000e+00> : vector<16x128xf32>
    %47 = tpu.matmul %45, %46, %cst_38 {dimension_numbers = #tpu.dot_dimension_numbers<[1], [0], [0], [1], [0, 0, 1, 1], [], []>} : vector<16x128xf32>, vector<128x128xf32>, vector<16x128xf32> -> vector<16x128xf32>
    %c0_39 = arith.constant 0 : index
    %c0_40 = arith.constant 0 : index
    %48 = vector.load %arg5[%c0_39, %c0_40] : memref<1x128xf32, #tpu.memory_space<vmem>>, vector<1x128xf32>
    %49 = vector.broadcast %48 : vector<1x128xf32> to vector<16x128xf32>
    %50 = arith.addf %47, %49 : vector<16x128xf32>
    %c0_41 = arith.constant 0 : index
    %c0_42 = arith.constant 0 : index
    %51 = vector.load %arg6[%c0_41, %c0_42] : memref<16x128xf32, #tpu.memory_space<vmem>>, vector<16x128xf32>
    tpu.vector_store %arg6[%c0_41, %c0_42], %50 {strides = array<i32>} : memref<16x128xf32, #tpu.memory_space<vmem>>, vector<16x128xf32>,
    return
  }
  func.func @transform_0(%arg0: i32) -> (i32, i32) {
    %c0_i32 = arith.constant 0 : i32
    %c0_i32_0 = arith.constant 0 : i32
    return %arg0, %c0_i32 : i32, i32
  }
  func.func @transform_1(%arg0: i32) -> (i32, i32) {
    %c0_i32 = arith.constant 0 : i32
    %c0_i32_0 = arith.constant 0 : i32
    %c0_i32_1 = arith.constant 0 : i32
    return %c0_i32, %c0_i32_0 : i32, i32
  }
  func.func @transform_2(%arg0: i32) -> (i32, i32) {
    %c0_i32 = arith.constant 0 : i32
    %c0_i32_0 = arith.constant 0 : i32
    %c0_i32_1 = arith.constant 0 : i32
    return %c0_i32, %c0_i32_0 : i32, i32
  }
  func.func @transform_3(%arg0: i32) -> (i32, i32) {
    %c0_i32 = arith.constant 0 : i32
    %c0_i32_0 = arith.constant 0 : i32
    %c0_i32_1 = arith.constant 0 : i32
    return %c0_i32, %c0_i32_0 : i32, i32
  }
  func.func @transform_4(%arg0: i32) -> (i32, i32) {
    %c0_i32 = arith.constant 0 : i32
    %c0_i32_0 = arith.constant 0 : i32
    %c0_i32_1 = arith.constant 0 : i32
    return %c0_i32, %c0_i32_0 : i32, i32
  }
  func.func @transform_5(%arg0: i32) -> (i32, i32) {
    %c0_i32 = arith.constant 0 : i32
    %c0_i32_0 = arith.constant 0 : i32
    return %arg0, %c0_i32 : i32, i32
  }
}

</mosaic_0001>

<llo_original>
// kernel: mlp_forward.1
$region0: #{mlp_forward.1}
  #allocation0 [shape = 'u32[]', space=smem, size = 0x4, offset = 0x4, fixed_abs, tag = 'smem constant byte address 0x4 - core index']
  #allocation1 [shape = 'u32[72,128]{1,0:T(1,128)}', space=vmem, size = 0x9000, scoped, tag = 'internal scratch']
  #allocation2 [shape = 'f32[16,128]{1,0:T(8,128)}', space=vmem, size = 0x2000, scoped, tag = 'scratch operand']
  #allocation3 [shape = 'f32[16,128]{1,0:T(8,128)}', space=vmem, size = 0x2000, scoped, tag = 'scratch operand']
  %s0 = inlined_call_operand.vmem [shape: f32[16,128], index: 0, kind: input, shape index: {}]
  %s1 = inlined_call_operand.vmem [shape: f32[128,128], index: 1, kind: input, shape index: {}]
  %s2 = inlined_call_operand.vmem [shape: f32[1,128], index: 2, kind: input, shape index: {}]
  %s3 = inlined_call_operand.vmem [shape: f32[128,128], index: 3, kind: input, shape index: {}]
  %s4 = inlined_call_operand.vmem [shape: f32[1,128], index: 4, kind: input, shape index: {}]
  %s5 = inlined_call_operand.vmem [shape: f32[16,128], index: 5, kind: output, shape index: {}]
  %s6 = sld [smem:[#allocation0]]
  $region30: #{mlp_forward.1} parent=0
    _
  %s8 = ssub.s32 1, %s6
  %s9 = scalar_select 0, %s8, %s6
  // Predicated region
  $region2: #{mlp_forward.1} parent=0 // pred_check
    _
  $region3: #{mlp_forward.1} parent=0 // pred_check_branch
    %11 = sbr.rel (0) target = $region5
  $region4: #{mlp_forward.1} parent=0 // pred_region
    _
  $region5: #{mlp_forward.1} parent=0 // pred_fallthru
    _
  // Predicated region
  $region6: #{mlp_forward.1} parent=0 // pred_check
    _
  $region7: #{mlp_forward.1} parent=0 // pred_check_branch
    %13 = sbr.rel (0) target = $region9
  $region8: #{mlp_forward.1} parent=0 // pred_region
    _
  $region9: #{mlp_forward.1} parent=0 // pred_fallthru
    _
  // Predicated region
  $region10: #{mlp_forward.1} parent=0 // pred_check
    _
  $region11: #{mlp_forward.1} parent=0 // pred_check_branch
    %15 = sbr.rel (0) target = $region13
  $region12: #{mlp_forward.1} parent=0 // pred_region
    _
  $region13: #{mlp_forward.1} parent=0 // pred_fallthru
    _
  // Predicated region
  $region14: #{mlp_forward.1} parent=0 // pred_check
    _
  $region15: #{mlp_forward.1} parent=0 // pred_check_branch
    %17 = sbr.rel (0) target = $region17
  $region16: #{mlp_forward.1} parent=0 // pred_region
    _
  $region17: #{mlp_forward.1} parent=0 // pred_fallthru
    _
  // Predicated region
  $region18: #{mlp_forward.1} parent=0 // pred_check
    _
  $region19: #{mlp_forward.1} parent=0 // pred_check_branch
    %19 = sbr.rel (0) target = $region21
  $region20: #{mlp_forward.1} parent=0 // pred_region
    _
  $region21: #{mlp_forward.1} parent=0 // pred_fallthru
    _
  %v20 = vld [vmem:[%s0] sm:$0xff]
  %v21 = vld [vmem:[%s0 + $0x8] sm:$0xff]
  %v22 = vld [vmem:[%s1] sm:$0xff]
  %v23 = vld [vmem:[%s1 + $0x8] sm:$0xff]
  %v24 = vld [vmem:[%s1 + $0x10] sm:$0xff]
  %v25 = vld [vmem:[%s1 + $0x18] sm:$0xff]
  %v26 = vld [vmem:[%s1 + $0x20] sm:$0xff]
  %v27 = vld [vmem:[%s1 + $0x28] sm:$0xff]
  %v28 = vld [vmem:[%s1 + $0x30] sm:$0xff]
  %v29 = vld [vmem:[%s1 + $0x38] sm:$0xff]
  %v30 = vld [vmem:[%s1 + $0x40] sm:$0xff]
  %v31 = vld [vmem:[%s1 + $0x48] sm:$0xff]
  %v32 = vld [vmem:[%s1 + $0x50] sm:$0xff]
  %v33 = vld [vmem:[%s1 + $0x58] sm:$0xff]
  %v34 = vld [vmem:[%s1 + $0x60] sm:$0xff]
  %v35 = vld [vmem:[%s1 + $0x68] sm:$0xff]
  %v36 = vld [vmem:[%s1 + $0x70] sm:$0xff]
  %v37 = vld [vmem:[%s1 + $0x78] sm:$0xff]
  %v38 = vld [vmem:[%s2] sm:$0x1]
  %v40 = vperm.slane %v38, 0
  %42 = vmatpush.msra.mxu0 %v37
  %43 = vmatpush.msra.mxu0 %v36
  %44 = vmatpush.msra.mxu0 %v35
  %45 = vmatpush.msra.mxu0 %v34
  %46 = vmatpush.msra.mxu0 %v33
  %47 = vmatpush.msra.mxu0 %v32
  %48 = vmatpush.msra.mxu0 %v31
  %49 = vmatpush.msra.mxu0 %v30
  %50 = vmatpush.msra.mxu0 %v29
  %51 = vmatpush.msra.mxu0 %v28
  %52 = vmatpush.msra.mxu0 %v27
  %53 = vmatpush.msra.mxu0 %v26
  %54 = vmatpush.msra.mxu0 %v25
  %55 = vmatpush.msra.mxu0 %v24
  %56 = vmatpush.msra.mxu0 %v23
  %57 = vmatpush.msra.mxu0 %v22
  %58 = vmatmul.f32.gmra.mxu0 %v20
  %v59 = vpop.f32.mrf.mxu0
  %v60 = vadd.f32 %v40, %v59
  %61 = vmatmul.f32.gmra.mxu0 %v21
  %v62 = vpop.f32.mrf.mxu0
  %v63 = vadd.f32 %v40, %v62
  %64 = vdwg.mxu0
  %v65 = vmul.f32 %v60, 0.5
  %v66 = vmul.f32 %v63, 0.5
  %v67 = vmul.f32 %v60, 0.70710677
  %v68 = vmul.f32 %v63, 0.70710677
  %v69 = vmul.f32 %v67, %v67
  %v70 = vmin.f32 16.0, %v69
  %v71 = vmul.f32 %v70, 2.1237322e-06
  %v72 = vadd.f32 %v71, 0.00028619796
  %v73 = vmul.f32 %v70, %v72
  %v74 = vadd.f32 %v73, 0.0036580483
  %v75 = vmul.f32 %v70, %v74
  %v76 = vadd.f32 %v75, 0.05243302
  %v77 = vmul.f32 %v70, %v76
  %v78 = vadd.f32 %v77, 0.18741608
  %v79 = vmul.f32 %v70, %v78
  %v80 = vadd.f32 %v79, 1.1283791
  %v81 = vmul.f32 %v67, %v80
  %v82 = vmul.f32 %v70, 3.8918573e-05
  %v83 = vadd.f32 %v82, 0.001143296
  %v84 = vmul.f32 %v70, %v83
  %v85 = vadd.f32 %v84, 0.014752088
  %v86 = vmul.f32 %v70, %v85
  %v87 = vadd.f32 %v86, 0.112945676
  %v88 = vmul.f32 %v70, %v87
  %v89 = vadd.f32 %v88, 0.4994258
  %v90 = vmul.f32 %v70, %v89
  %v91 = vadd.f32 %v90, 1.0
  %v92 = vrcp.pop %v91
  %v93 = vmul.f32 %v91, %v92
  %v94 = vsub.f32 1.0, %v93
  %v95 = vmul.f32 %v92, %v94
  %v96 = vadd.f32 %v92, %v95
  %vm97 = vweird.f32 %v91
  %vm98 = vweird.f32 %v92
  %vm99 = vmor %vm97, %vm98
  %v100 = vsel %vm99, %v92, %v96
  %v101 = vand.u32 2147483647, %v91
  %vm102 = vcmp.eq.f32.partialorder %v101, 8.507059e+37
  %v103 = vand.u32 %v91, 2147483648
  %v104 = vor.u32 1.1754944e-38, %v103
  %v105 = vsel %vm102, %v104, %v100
  %v106 = vmul.f32 %v81, %v105
  %v107 = vmin.f32 %v106, 1.0
  %v108 = vmax.f32 %v107, -1.0
  %v109 = vmul.f32 %v68, %v68
  %v110 = vmin.f32 16.0, %v109
  %v111 = vmul.f32 %v110, 2.1237322e-06
  %v112 = vadd.f32 %v111, 0.00028619796
  %v113 = vmul.f32 %v110, %v112
  %v114 = vadd.f32 %v113, 0.0036580483
  %v115 = vmul.f32 %v110, %v114
  %v116 = vadd.f32 %v115, 0.05243302
  %v117 = vmul.f32 %v110, %v116
  %v118 = vadd.f32 %v117, 0.18741608
  %v119 = vmul.f32 %v110, %v118
  %v120 = vadd.f32 %v119, 1.1283791
  %v121 = vmul.f32 %v68, %v120
  %v122 = vmul.f32 %v110, 3.8918573e-05
  %v123 = vadd.f32 %v122, 0.001143296
  %v124 = vmul.f32 %v110, %v123
  %v125 = vadd.f32 %v124, 0.014752088
  %v126 = vmul.f32 %v110, %v125
  %v127 = vadd.f32 %v126, 0.112945676
  %v128 = vmul.f32 %v110, %v127
  %v129 = vadd.f32 %v128, 0.4994258
  %v130 = vmul.f32 %v110, %v129
  %v131 = vadd.f32 %v130, 1.0
  %v132 = vrcp.pop %v131
  %v133 = vmul.f32 %v131, %v132
  %v134 = vsub.f32 1.0, %v133
  %v135 = vmul.f32 %v132, %v134
  %v136 = vadd.f32 %v132, %v135
  %vm137 = vweird.f32 %v131
  %vm138 = vweird.f32 %v132
  %vm139 = vmor %vm137, %vm138
  %v140 = vsel %vm139, %v132, %v136
  %v141 = vand.u32 2147483647, %v131
  %vm142 = vcmp.eq.f32.partialorder %v141, 8.507059e+37
  %v143 = vand.u32 %v131, 2147483648
  %v144 = vor.u32 1.1754944e-38, %v143
  %v145 = vsel %vm142, %v144, %v140
  %v146 = vmul.f32 %v121, %v145
  %v147 = vmin.f32 %v146, 1.0
  %v148 = vmax.f32 %v147, -1.0
  %v149 = vadd.f32 %v108, 1.0
  %v150 = vadd.f32 %v148, 1.0
  %v151 = vmul.f32 %v65, %v149
  %v152 = vmul.f32 %v66, %v150
  %153 = vst [vmem:[#allocation2] sm:$0xff] %v151
  %154 = vst [vmem:[#allocation2 + $0x8] sm:$0xff] %v152
  %v155 = vld [vmem:[#allocation2] sm:$0xff]
  %v156 = vld [vmem:[#allocation2 + $0x8] sm:$0xff]
  %v157 = vld [vmem:[%s3] sm:$0xff]
  %v158 = vld [vmem:[%s3 + $0x8] sm:$0xff]
  %v159 = vld [vmem:[%s3 + $0x10] sm:$0xff]
  %v160 = vld [vmem:[%s3 + $0x18] sm:$0xff]
  %v161 = vld [vmem:[%s3 + $0x20] sm:$0xff]
  %v162 = vld [vmem:[%s3 + $0x28] sm:$0xff]
  %v163 = vld [vmem:[%s3 + $0x30] sm:$0xff]
  %v164 = vld [vmem:[%s3 + $0x38] sm:$0xff]
  %v165 = vld [vmem:[%s3 + $0x40] sm:$0xff]
  %v166 = vld [vmem:[%s3 + $0x48] sm:$0xff]
  %v167 = vld [vmem:[%s3 + $0x50] sm:$0xff]
  %v168 = vld [vmem:[%s3 + $0x58] sm:$0xff]
  %v169 = vld [vmem:[%s3 + $0x60] sm:$0xff]
  %v170 = vld [vmem:[%s3 + $0x68] sm:$0xff]
  %v171 = vld [vmem:[%s3 + $0x70] sm:$0xff]
  %v172 = vld [vmem:[%s3 + $0x78] sm:$0xff]
  %v173 = vld [vmem:[%s4] sm:$0x1]
  %v175 = vperm.slane %v173, 0
  %177 = vmatpush.msra.mxu0 %v172
  %178 = vmatpush.msra.mxu0 %v171
  %179 = vmatpush.msra.mxu0 %v170
  %180 = vmatpush.msra.mxu0 %v169
  %181 = vmatpush.msra.mxu0 %v168
  %182 = vmatpush.msra.mxu0 %v167
  %183 = vmatpush.msra.mxu0 %v166
  %184 = vmatpush.msra.mxu0 %v165
  %185 = vmatpush.msra.mxu0 %v164
  %186 = vmatpush.msra.mxu0 %v163
  %187 = vmatpush.msra.mxu0 %v162
  %188 = vmatpush.msra.mxu0 %v161
  %189 = vmatpush.msra.mxu0 %v160
  %190 = vmatpush.msra.mxu0 %v159
  %191 = vmatpush.msra.mxu0 %v158
  %192 = vmatpush.msra.mxu0 %v157
  %193 = vmatmul.f32.gmra.mxu0 %v155
  %v194 = vpop.f32.mrf.mxu0
  %v195 = vadd.f32 %v175, %v194
  %196 = vmatmul.f32.gmra.mxu0 %v156
  %v197 = vpop.f32.mrf.mxu0
  %v198 = vadd.f32 %v175, %v197
  %199 = vdwg.mxu0
  %v200 = vmul.f32 %v195, 0.5
  %v201 = vmul.f32 %v198, 0.5
  %v202 = vmul.f32 %v195, 0.70710677
  %v203 = vmul.f32 %v198, 0.70710677
  %v204 = vmul.f32 %v202, %v202
  %v205 = vmin.f32 16.0, %v204
  %v206 = vmul.f32 %v205, 2.1237322e-06
  %v207 = vadd.f32 %v206, 0.00028619796
  %v208 = vmul.f32 %v205, %v207
  %v209 = vadd.f32 %v208, 0.0036580483
  %v210 = vmul.f32 %v205, %v209
  %v211 = vadd.f32 %v210, 0.05243302
  %v212 = vmul.f32 %v205, %v211
  %v213 = vadd.f32 %v212, 0.18741608
  %v214 = vmul.f32 %v205, %v213
  %v215 = vadd.f32 %v214, 1.1283791
  %v216 = vmul.f32 %v202, %v215
  %v217 = vmul.f32 %v205, 3.8918573e-05
  %v218 = vadd.f32 %v217, 0.001143296
  %v219 = vmul.f32 %v205, %v218
  %v220 = vadd.f32 %v219, 0.014752088
  %v221 = vmul.f32 %v205, %v220
  %v222 = vadd.f32 %v221, 0.112945676
  %v223 = vmul.f32 %v205, %v222
  %v224 = vadd.f32 %v223, 0.4994258
  %v225 = vmul.f32 %v205, %v224
  %v226 = vadd.f32 %v225, 1.0
  %v227 = vrcp.pop %v226
  %v228 = vmul.f32 %v226, %v227
  %v229 = vsub.f32 1.0, %v228
  %v230 = vmul.f32 %v227, %v229
  %v231 = vadd.f32 %v227, %v230
  %vm232 = vweird.f32 %v226
  %vm233 = vweird.f32 %v227
  %vm234 = vmor %vm232, %vm233
  %v235 = vsel %vm234, %v227, %v231
  %v236 = vand.u32 2147483647, %v226
  %vm237 = vcmp.eq.f32.partialorder %v236, 8.507059e+37
  %v238 = vand.u32 %v226, 2147483648
  %v239 = vor.u32 1.1754944e-38, %v238
  %v240 = vsel %vm237, %v239, %v235
  %v241 = vmul.f32 %v216, %v240
  %v242 = vmin.f32 %v241, 1.0
  %v243 = vmax.f32 %v242, -1.0
  %v244 = vmul.f32 %v203, %v203
  %v245 = vmin.f32 16.0, %v244
  %v246 = vmul.f32 %v245, 2.1237322e-06
  %v247 = vadd.f32 %v246, 0.00028619796
  %v248 = vmul.f32 %v245, %v247
  %v249 = vadd.f32 %v248, 0.0036580483
  %v250 = vmul.f32 %v245, %v249
  %v251 = vadd.f32 %v250, 0.05243302
  %v252 = vmul.f32 %v245, %v251
  %v253 = vadd.f32 %v252, 0.18741608
  %v254 = vmul.f32 %v245, %v253
  %v255 = vadd.f32 %v254, 1.1283791
  %v256 = vmul.f32 %v203, %v255
  %v257 = vmul.f32 %v245, 3.8918573e-05
  %v258 = vadd.f32 %v257, 0.001143296
  %v259 = vmul.f32 %v245, %v258
  %v260 = vadd.f32 %v259, 0.014752088
  %v261 = vmul.f32 %v245, %v260
  %v262 = vadd.f32 %v261, 0.112945676
  %v263 = vmul.f32 %v245, %v262
  %v264 = vadd.f32 %v263, 0.4994258
  %v265 = vmul.f32 %v245, %v264
  %v266 = vadd.f32 %v265, 1.0
  %v267 = vrcp.pop %v266
  %v268 = vmul.f32 %v266, %v267
  %v269 = vsub.f32 1.0, %v268
  %v270 = vmul.f32 %v267, %v269
  %v271 = vadd.f32 %v267, %v270
  %vm272 = vweird.f32 %v266
  %vm273 = vweird.f32 %v267
  %vm274 = vmor %vm272, %vm273
  %v275 = vsel %vm274, %v267, %v271
  %v276 = vand.u32 2147483647, %v266
  %vm277 = vcmp.eq.f32.partialorder %v276, 8.507059e+37
  %v278 = vand.u32 %v266, 2147483648
  %v279 = vor.u32 1.1754944e-38, %v278
  %v280 = vsel %vm277, %v279, %v275
  %v281 = vmul.f32 %v256, %v280
  %v282 = vmin.f32 %v281, 1.0
  %v283 = vmax.f32 %v282, -1.0
  %v284 = vadd.f32 %v243, 1.0
  %v285 = vadd.f32 %v283, 1.0
  %v286 = vmul.f32 %v200, %v284
  %v287 = vmul.f32 %v201, %v285
  %288 = vst [vmem:[#allocation3] sm:$0xff] %v286
  %289 = vst [vmem:[#allocation3 + $0x8] sm:$0xff] %v287
  %v290 = vld [vmem:[#allocation3] sm:$0xff]
  %v291 = vld [vmem:[#allocation3 + $0x8] sm:$0xff]
  %v292 = vld [vmem:[%s1] sm:$0xff]
  %v293 = vld [vmem:[%s1 + $0x8] sm:$0xff]
  %v294 = vld [vmem:[%s1 + $0x10] sm:$0xff]
  %v295 = vld [vmem:[%s1 + $0x18] sm:$0xff]
  %v296 = vld [vmem:[%s1 + $0x20] sm:$0xff]
  %v297 = vld [vmem:[%s1 + $0x28] sm:$0xff]
  %v298 = vld [vmem:[%s1 + $0x30] sm:$0xff]
  %v299 = vld [vmem:[%s1 + $0x38] sm:$0xff]
  %v300 = vld [vmem:[%s1 + $0x40] sm:$0xff]
  %v301 = vld [vmem:[%s1 + $0x48] sm:$0xff]
  %v302 = vld [vmem:[%s1 + $0x50] sm:$0xff]
  %v303 = vld [vmem:[%s1 + $0x58] sm:$0xff]
  %v304 = vld [vmem:[%s1 + $0x60] sm:$0xff]
  %v305 = vld [vmem:[%s1 + $0x68] sm:$0xff]
  %v306 = vld [vmem:[%s1 + $0x70] sm:$0xff]
  %v307 = vld [vmem:[%s1 + $0x78] sm:$0xff]
  %v308 = vld [vmem:[%s2] sm:$0x1]
  %v310 = vperm.slane %v308, 0
  %312 = vmatpush.msra.mxu0 %v307
  %313 = vmatpush.msra.mxu0 %v306
  %314 = vmatpush.msra.mxu0 %v305
  %315 = vmatpush.msra.mxu0 %v304
  %316 = vmatpush.msra.mxu0 %v303
  %317 = vmatpush.msra.mxu0 %v302
  %318 = vmatpush.msra.mxu0 %v301
  %319 = vmatpush.msra.mxu0 %v300
  %320 = vmatpush.msra.mxu0 %v299
  %321 = vmatpush.msra.mxu0 %v298
  %322 = vmatpush.msra.mxu0 %v297
  %323 = vmatpush.msra.mxu0 %v296
  %324 = vmatpush.msra.mxu0 %v295
  %325 = vmatpush.msra.mxu0 %v294
  %326 = vmatpush.msra.mxu0 %v293
  %327 = vmatpush.msra.mxu0 %v292
  %328 = vmatmul.f32.gmra.mxu0 %v290
  %v329 = vpop.f32.mrf.mxu0
  %v330 = vadd.f32 %v310, %v329
  %331 = vmatmul.f32.gmra.mxu0 %v291
  %v332 = vpop.f32.mrf.mxu0
  %v333 = vadd.f32 %v310, %v332
  %334 = vdwg.mxu0
  %v335 = vmul.f32 %v330, 0.5
  %v336 = vmul.f32 %v333, 0.5
  %v337 = vmul.f32 %v330, 0.70710677
  %v338 = vmul.f32 %v333, 0.70710677
  %v339 = vmul.f32 %v337, %v337
  %v340 = vmin.f32 16.0, %v339
  %v341 = vmul.f32 %v340, 2.1237322e-06
  %v342 = vadd.f32 %v341, 0.00028619796
  %v343 = vmul.f32 %v340, %v342
  %v344 = vadd.f32 %v343, 0.0036580483
  %v345 = vmul.f32 %v340, %v344
  %v346 = vadd.f32 %v345, 0.05243302
  %v347 = vmul.f32 %v340, %v346
  %v348 = vadd.f32 %v347, 0.18741608
  %v349 = vmul.f32 %v340, %v348
  %v350 = vadd.f32 %v349, 1.1283791
  %v351 = vmul.f32 %v337, %v350
  %v352 = vmul.f32 %v340, 3.8918573e-05
  %v353 = vadd.f32 %v352, 0.001143296
  %v354 = vmul.f32 %v340, %v353
  %v355 = vadd.f32 %v354, 0.014752088
  %v356 = vmul.f32 %v340, %v355
  %v357 = vadd.f32 %v356, 0.112945676
  %v358 = vmul.f32 %v340, %v357
  %v359 = vadd.f32 %v358, 0.4994258
  %v360 = vmul.f32 %v340, %v359
  %v361 = vadd.f32 %v360, 1.0
  %v362 = vrcp.pop %v361
  %v363 = vmul.f32 %v361, %v362
  %v364 = vsub.f32 1.0, %v363
  %v365 = vmul.f32 %v362, %v364
  %v366 = vadd.f32 %v362, %v365
  %vm367 = vweird.f32 %v361
  %vm368 = vweird.f32 %v362
  %vm369 = vmor %vm367, %vm368
  %v370 = vsel %vm369, %v362, %v366
  %v371 = vand.u32 2147483647, %v361
  %vm372 = vcmp.eq.f32.partialorder %v371, 8.507059e+37
  %v373 = vand.u32 %v361, 2147483648
  %v374 = vor.u32 1.1754944e-38, %v373
  %v375 = vsel %vm372, %v374, %v370
  %v376 = vmul.f32 %v351, %v375
  %v377 = vmin.f32 %v376, 1.0
  %v378 = vmax.f32 %v377, -1.0
  %v379 = vmul.f32 %v338, %v338
  %v380 = vmin.f32 16.0, %v379
  %v381 = vmul.f32 %v380, 2.1237322e-06
  %v382 = vadd.f32 %v381, 0.00028619796
  %v383 = vmul.f32 %v380, %v382
  %v384 = vadd.f32 %v383, 0.0036580483
  %v385 = vmul.f32 %v380, %v384
  %v386 = vadd.f32 %v385, 0.05243302
  %v387 = vmul.f32 %v380, %v386
  %v388 = vadd.f32 %v387, 0.18741608
  %v389 = vmul.f32 %v380, %v388
  %v390 = vadd.f32 %v389, 1.1283791
  %v391 = vmul.f32 %v338, %v390
  %v392 = vmul.f32 %v380, 3.8918573e-05
  %v393 = vadd.f32 %v392, 0.001143296
  %v394 = vmul.f32 %v380, %v393
  %v395 = vadd.f32 %v394, 0.014752088
  %v396 = vmul.f32 %v380, %v395
  %v397 = vadd.f32 %v396, 0.112945676
  %v398 = vmul.f32 %v380, %v397
  %v399 = vadd.f32 %v398, 0.4994258
  %v400 = vmul.f32 %v380, %v399
  %v401 = vadd.f32 %v400, 1.0
  %v402 = vrcp.pop %v401
  %v403 = vmul.f32 %v401, %v402
  %v404 = vsub.f32 1.0, %v403
  %v405 = vmul.f32 %v402, %v404
  %v406 = vadd.f32 %v402, %v405
  %vm407 = vweird.f32 %v401
  %vm408 = vweird.f32 %v402
  %vm409 = vmor %vm407, %vm408
  %v410 = vsel %vm409, %v402, %v406
  %v411 = vand.u32 2147483647, %v401
  %vm412 = vcmp.eq.f32.partialorder %v411, 8.507059e+37
  %v413 = vand.u32 %v401, 2147483648
  %v414 = vor.u32 1.1754944e-38, %v413
  %v415 = vsel %vm412, %v414, %v410
  %v416 = vmul.f32 %v391, %v415
  %v417 = vmin.f32 %v416, 1.0
  %v418 = vmax.f32 %v417, -1.0
  %v419 = vadd.f32 %v378, 1.0
  %v420 = vadd.f32 %v418, 1.0
  %v421 = vmul.f32 %v335, %v419
  %v422 = vmul.f32 %v336, %v420
  %423 = vst [vmem:[#allocation2] sm:$0xff] %v421
  %424 = vst [vmem:[#allocation2 + $0x8] sm:$0xff] %v422
  %v425 = vld [vmem:[#allocation2] sm:$0xff]
  %v426 = vld [vmem:[#allocation2 + $0x8] sm:$0xff]
  %v427 = vld [vmem:[%s3] sm:$0xff]
  %v428 = vld [vmem:[%s3 + $0x8] sm:$0xff]
  %v429 = vld [vmem:[%s3 + $0x10] sm:$0xff]
  %v430 = vld [vmem:[%s3 + $0x18] sm:$0xff]
  %v431 = vld [vmem:[%s3 + $0x20] sm:$0xff]
  %v432 = vld [vmem:[%s3 + $0x28] sm:$0xff]
  %v433 = vld [vmem:[%s3 + $0x30] sm:$0xff]
  %v434 = vld [vmem:[%s3 + $0x38] sm:$0xff]
  %v435 = vld [vmem:[%s3 + $0x40] sm:$0xff]
  %v436 = vld [vmem:[%s3 + $0x48] sm:$0xff]
  %v437 = vld [vmem:[%s3 + $0x50] sm:$0xff]
  %v438 = vld [vmem:[%s3 + $0x58] sm:$0xff]
  %v439 = vld [vmem:[%s3 + $0x60] sm:$0xff]
  %v440 = vld [vmem:[%s3 + $0x68] sm:$0xff]
  %v441 = vld [vmem:[%s3 + $0x70] sm:$0xff]
  %v442 = vld [vmem:[%s3 + $0x78] sm:$0xff]
  %v443 = vld [vmem:[%s4] sm:$0x1]
  %v445 = vperm.slane %v443, 0
  %447 = vmatpush.msra.mxu0 %v442
  %448 = vmatpush.msra.mxu0 %v441
  %449 = vmatpush.msra.mxu0 %v440
  %450 = vmatpush.msra.mxu0 %v439
  %451 = vmatpush.msra.mxu0 %v438
  %452 = vmatpush.msra.mxu0 %v437
  %453 = vmatpush.msra.mxu0 %v436
  %454 = vmatpush.msra.mxu0 %v435
  %455 = vmatpush.msra.mxu0 %v434
  %456 = vmatpush.msra.mxu0 %v433
  %457 = vmatpush.msra.mxu0 %v432
  %458 = vmatpush.msra.mxu0 %v431
  %459 = vmatpush.msra.mxu0 %v430
  %460 = vmatpush.msra.mxu0 %v429
  %461 = vmatpush.msra.mxu0 %v428
  %462 = vmatpush.msra.mxu0 %v427
  %463 = vmatmul.f32.gmra.mxu0 %v425
  %v464 = vpop.f32.mrf.mxu0
  %v465 = vadd.f32 %v445, %v464
  %466 = vmatmul.f32.gmra.mxu0 %v426
  %v467 = vpop.f32.mrf.mxu0
  %v468 = vadd.f32 %v445, %v467
  %469 = vdwg.mxu0
  %470 = vst [vmem:[%s5] sm:$0xff] %v465
  %471 = vst [vmem:[%s5 + $0x8] sm:$0xff] %v468
  // Predicated region
  $region22: #{mlp_forward.1} parent=0 // pred_check
    _
  $region23: #{mlp_forward.1} parent=0 // pred_check_branch
    %473 = sbr.rel (0) target = $region25
  $region24: #{mlp_forward.1} parent=0 // pred_region
    _
  $region25: #{mlp_forward.1} parent=0 // pred_fallthru
    _
  // Predicated region
  $region26: #{mlp_forward.1} parent=0 // pred_check
    _
  $region27: #{mlp_forward.1} parent=0 // pred_check_branch
    %475 = sbr.rel (0) target = $region29
  $region28: #{mlp_forward.1} parent=0 // pred_region
    _
  $region29: #{mlp_forward.1} parent=0 // pred_fallthru
    _

</llo_original>
